<compile_context>
chip_gen: v7x
topology: tpu7x:2x2x1
jax: 0.10.0
libtpu: 0.0.40
codegen_flags: <defaults>
</compile_context>

<pallas_src>
import functools

import jax
import jax.numpy as jnp
from jax.experimental import pallas as pl
from jax.experimental.pallas import tpu as pltpu


def _frozen_bn_kernel(x_ref, ss_ref, o_ref, *, fuse_relu):
    # x_ref: (TR, TC); ss_ref: (TR, 2) f32 with col 0 = scale, col 1 = shift.
    x = x_ref[...].astype(jnp.float32)
    y = x * ss_ref[:, 0:1] + ss_ref[:, 1:2]
    if fuse_relu:
        y = jnp.maximum(y, jnp.float32(0.0))
    o_ref[...] = y.astype(o_ref.dtype)


def _tpu_generation():
    try:
        kind = jax.devices()[0].device_kind.lower()
    except Exception:
        return 0
    for g in (7, 6, 5, 4):
        if f"v{g}" in kind:
            return g
    return 0


def _sublane_align(dtype):
    # Sub-32-bit dtypes pack along sublanes: 8 rows/f32, 16/bf16, 32/int8.
    packing = max(1, 4 // jnp.dtype(dtype).itemsize)
    return 8 * packing


def _tile_config(rows, cols, itemsize, sub_align):
    gen = _tpu_generation()
    if gen in (4, 5, 6):
        # 128 MiB physical VMEM: bigger tiles -> fewer grid steps, longer DMAs.
        tile_budget = 8 * 1024 * 1024
        pref_tc = 8192
        vmem_limit = 64 * 1024 * 1024
        want_split = False
    else:
        # v7x (or unknown -> conservative): 64 MiB physical / 32 MiB scoped,
        # 2 TensorCores per chip.
        tile_budget = 4 * 1024 * 1024
        pref_tc = 4096
        vmem_limit = 32 * 1024 * 1024
        want_split = True

    # Lane (column) tile: take cols WHOLE whenever at least one aligned row
    # block fits the budget — avoids ragged col tails and masked partial
    # stores for non-128-multiple spatial sizes (7x7, 14x14, 28x28, ...).
    if cols * itemsize * sub_align <= tile_budget:
        tc = cols
    else:
        tc = max(128, (pref_tc // 128) * 128)

    # Row (sublane) tile: fill the remaining per-tile budget.
    tr = max(1, tile_budget // (tc * itemsize))
    if tr >= rows:
        tr = rows  # whole-dim block is always layout-legal
    else:
        tr = max(sub_align, (tr // sub_align) * sub_align)

    # v7x: make sure both TensorCores get at least one block each.
    if want_split and tr >= rows and pl.cdiv(cols, tc) < 2 and rows >= 2 * sub_align:
        tr = max(sub_align, (rows // 2 // sub_align) * sub_align)

    return tr, tc, vmem_limit


def frozen_batch_norm_2d(x, weight, bias, running_mean, running_var, eps=1e-5,
                         fuse_relu=False, donate_input=False, tile_override=None):
    """FrozenBatchNorm2d forward (optionally fused with ReLU).

    x: (N, C, H, W); weight/bias/running_mean/running_var: (C,).
    """
    N, C, H, W = x.shape
    rows = N * C
    cols = H * W

    # Fold the four frozen buffers into a single packed (rows, 2) f32
    # [scale | shift] array: one param DMA per row tile, rsqrt outside kernel.
    w32 = weight.astype(jnp.float32)
    b32 = bias.astype(jnp.float32)
    rm32 = running_mean.astype(jnp.float32)
    rv32 = running_var.astype(jnp.float32)
    scale = w32 * jax.lax.rsqrt(rv32 + jnp.float32(eps))
    shift = b32 - rm32 * scale
    ss = jnp.stack([scale, shift], axis=-1)                   # (C, 2)
    ss = jnp.broadcast_to(ss[None], (N, C, 2)).reshape(rows, 2)

    # TODO(synk): an NHWC (N*H*W, C) path with a (1, C) lane-dense scale/shift
    # block would be fully lane-dense even for tiny spatial stages, but the
    # surrounding PSTR model is NCHW and the transpose costs a full extra HBM
    # pass, so we keep the free NCHW -> (N*C, H*W) reshape.
    x2d = x.reshape(rows, cols)

    itemsize = jnp.dtype(x.dtype).itemsize
    sub_align = _sublane_align(x.dtype)
    if tile_override is not None:
        TR, TC = tile_override
        vmem_limit = 32 * 1024 * 1024
    else:
        TR, TC, vmem_limit = _tile_config(rows, cols, itemsize, sub_align)

    nr = pl.cdiv(rows, TR)
    nc = pl.cdiv(cols, TC)

    # Put the axis with more blocks first so a 2-TC chip (v7x) can shard it.
    if nc > nr:
        grid = (nc, nr)
        x_spec = pl.BlockSpec((TR, TC), lambda j, i: (i, j))
        p_spec = pl.BlockSpec((TR, 2), lambda j, i: (i, 0))
    else:
        grid = (nr, nc)
        x_spec = pl.BlockSpec((TR, TC), lambda i, j: (i, j))
        p_spec = pl.BlockSpec((TR, 2), lambda i, j: (i, 0))

    flops_per_elem = 3 if fuse_relu else 2
    cost = pl.CostEstimate(
        flops=flops_per_elem * rows * cols,
        transcendentals=0,
        bytes_accessed=2 * rows * cols * itemsize + rows * 2 * 4,
    )

    kernel = functools.partial(_frozen_bn_kernel, fuse_relu=fuse_relu)

    call_kwargs = {}
    if donate_input:
        # x2d has the same shape/dtype as the output; reuse its HBM buffer.
        call_kwargs["input_output_aliases"] = {0: 0}

    out2d = pl.pallas_call(
        kernel,
        out_shape=jax.ShapeDtypeStruct((rows, cols), x.dtype),
        grid=grid,
        in_specs=[x_spec, p_spec],
        out_specs=x_spec,
        compiler_params=pltpu.CompilerParams(
            dimension_semantics=("parallel", "parallel"),
            vmem_limit_bytes=vmem_limit,
        ),
        cost_estimate=cost,
        **call_kwargs,
    )(x2d, ss)

    return out2d.reshape(N, C, H, W)


def _reference(x, weight, bias, running_mean, running_var, eps=1e-5, fuse_relu=False):
    x32 = x.astype(jnp.float32)
    w = weight.reshape(1, -1, 1, 1).astype(jnp.float32)
    b = bias.reshape(1, -1, 1, 1).astype(jnp.float32)
    rv = running_var.reshape(1, -1, 1, 1).astype(jnp.float32)
    rm = running_mean.reshape(1, -1, 1, 1).astype(jnp.float32)
    scale = w * jax.lax.rsqrt(rv + jnp.float32(eps))
    bb = b - rm * scale
    y = x32 * scale + bb
    if fuse_relu:
        y = jnp.maximum(y, 0.0)
    return y.astype(x.dtype)


if __name__ == "__main__":
    key = jax.random.PRNGKey(0)

    def make_case(k, shape, dtype):
        kx, kw, kb, km, kv = jax.random.split(k, 5)
        C = shape[1]
        x = jax.random.normal(kx, shape, dtype=jnp.float32).astype(dtype)
        weight = jnp.ones((C,), jnp.float32) + 0.1 * jax.random.normal(kw, (C,), jnp.float32)
        bias = 0.1 * jax.random.normal(kb, (C,), jnp.float32)
        running_mean = 0.1 * jax.random.normal(km, (C,), jnp.float32)
        running_var = jnp.ones((C,), jnp.float32) + 0.1 * jnp.abs(
            jax.random.normal(kv, (C,), jnp.float32))
        return x, weight, bias, running_mean, running_var

    k1, k2, k3 = jax.random.split(key, 3)

    # Case 1: canonical small shape; plain bn and fused bn+relu (as in kp).
    args = make_case(k1, (2, 4, 16, 16), jnp.float32)
    out = jax.block_until_ready(frozen_batch_norm_2d(*args))
    ref = _reference(*args)
    assert out.shape == (2, 4, 16, 16)
    assert jnp.allclose(out, ref, atol=1e-5, rtol=1e-5)

    out_r = jax.block_until_ready(frozen_batch_norm_2d(*args, fuse_relu=True))
    ref_r = _reference(*args, fuse_relu=True)
    assert jnp.allclose(out_r, ref_r, atol=1e-5, rtol=1e-5)

    # Case 2: bf16 + non-128-multiple spatial (7x7) -> whole-cols lane tile.
    args_bf = make_case(k2, (2, 12, 7, 7), jnp.bfloat16)
    out_bf = jax.block_until_ready(frozen_batch_norm_2d(*args_bf, fuse_relu=True))
    ref_bf = _reference(*args_bf, fuse_relu=True)
    assert jnp.allclose(out_bf.astype(jnp.float32), ref_bf.astype(jnp.float32),
                        atol=2e-2, rtol=2e-2)

    # Case 3: force a multi-block grid with ragged row/col tails to exercise
    # the tiled / out-of-bounds-masked store path (rows=18, cols=130).
    args_t = make_case(k3, (2, 9, 10, 13), jnp.float32)
    out_t = jax.block_until_ready(
        frozen_batch_norm_2d(*args_t, tile_override=(8, 128)))
    ref_t = _reference(*args_t)
    assert jnp.allclose(out_t, ref_t, atol=1e-5, rtol=1e-5)

    print("KERNEL_OK")
</pallas_src>

<mosaic_0001>
module attributes {stable_mosaic.version = 11 : i64} {
  func.func @_frozen_bn_kernel(%arg0: i32, %arg1: i32, %arg2: memref<8x256xf32, #tpu.memory_space<vmem>>, %arg3: memref<8x2xf32, #tpu.memory_space<vmem>>, %arg4: memref<8x256xf32, #tpu.memory_space<vmem>>) attributes {dimension_semantics = [#tpu.dimension_semantics<parallel>, #tpu.dimension_semantics<parallel>], iteration_bounds = array<i64: 1, 1>, scalar_prefetch = 0 : i64, scratch_operands = 0 : i64, tpu.core_type = #tpu.core_type<tc>, window_params = [{transform_indices = @transform_0, window_bounds = array<i64: 8, 256>}, {transform_indices = @transform_1, window_bounds = array<i64: 8, 2>}, {transform_indices = @transform_2, window_bounds = array<i64: 8, 256>}]} {
    %c0 = arith.constant 0 : index
    %c0_0 = arith.constant 0 : index
    %0 = vector.load %arg2[%c0, %c0_0] : memref<8x256xf32, #tpu.memory_space<vmem>>, vector<8x256xf32>
    %c0_1 = arith.constant 0 : index
    %c0_2 = arith.constant 0 : index
    %1 = vector.load %arg3[%c0_1, %c0_2] : memref<8x2xf32, #tpu.memory_space<vmem>>, vector<8x1xf32>
    %2 = vector.broadcast %1 : vector<8x1xf32> to vector<8x256xf32>
    %3 = arith.mulf %0, %2 : vector<8x256xf32>
    %c0_3 = arith.constant 0 : index
    %c1 = arith.constant 1 : index
    %4 = vector.load %arg3[%c0_3, %c1] : memref<8x2xf32, #tpu.memory_space<vmem>>, vector<8x1xf32>
    %5 = vector.broadcast %4 : vector<8x1xf32> to vector<8x256xf32>
    %6 = arith.addf %3, %5 : vector<8x256xf32>
    %c0_4 = arith.constant 0 : index
    %c0_5 = arith.constant 0 : index
    %7 = vector.load %arg4[%c0_4, %c0_5] : memref<8x256xf32, #tpu.memory_space<vmem>>, vector<8x256xf32>
    tpu.vector_store %arg4[%c0_4, %c0_5], %6 {strides = array<i32>} : memref<8x256xf32, #tpu.memory_space<vmem>>, vector<8x256xf32>,
    return
  }
  func.func @transform_0(%arg0: i32, %arg1: i32) -> (i32, i32) {
    %c0_i32 = arith.constant 0 : i32
    return %arg0, %arg1 : i32, i32
  }
  func.func @transform_1(%arg0: i32, %arg1: i32) -> (i32, i32) {
    %c0_i32 = arith.constant 0 : i32
    %c0_i32_0 = arith.constant 0 : i32
    return %arg0, %c0_i32 : i32, i32
  }
  func.func @transform_2(%arg0: i32, %arg1: i32) -> (i32, i32) {
    %c0_i32 = arith.constant 0 : i32
    return %arg0, %arg1 : i32, i32
  }
}

</mosaic_0001>

<llo_original>
// kernel: tpu_custom_call.1
$region0: #{tpu_custom_call.1}
  #allocation0 [shape = 'u32[]', space=smem, size = 0x4, offset = 0x4, fixed_abs, tag = 'smem constant byte address 0x4 - core index']
  #allocation1 [shape = 'u32[144,128]{1,0:T(1,128)}', space=vmem, size = 0x12000, scoped, tag = 'internal scratch']
  %s0 = inlined_call_operand.hbm [shape: f32[8,256], index: 0, kind: input, shape index: {}]
  %s1 = inlined_call_operand.vmem [shape: f32[8,2], index: 1, kind: input, shape index: {}]
  %s2 = inlined_call_operand.hbm [shape: f32[8,256], index: 2, kind: output, shape index: {}]
  %s3 = sld [smem:[#allocation0]]
  $region22: #{tpu_custom_call.1} parent=0
    _
  %s5 = ssub.s32 1, %s3
  %s6 = scalar_select 0, %s5, %s3
  $region1: #{tpu_custom_call.1} parent=0
    #allocation2 [shape = 'u8[8192]{0}', space=vmem, size = 0x2000, scoped, tag = 'input window, operand 0, single buffered']
    #allocation3 [shape = 's32[1]{0}', space=sflag, size = 0x4, scoped, tag = 'scoped memory for tpu_custom_call.1']
    #allocation4 [shape = 's32[1]{0}', space=sflag, size = 0x4, scoped, tag = 'scoped memory for tpu_custom_call.1']
    #allocation5 [shape = 'u8[8192]{0}', space=vmem, size = 0x2000, scoped, tag = 'output window, operand 0, single buffered']
    %7 = vsyncpa [#allocation3], 0
    %8 = vsyncpa [#allocation4], 0
    // Predicated region
    $region2: #{tpu_custom_call.1} parent=1 // pred_check
      _
    $region3: #{tpu_custom_call.1} parent=1 // pred_check_branch
      %10 = sbr.rel (0) target = $region5
    $region4: #{tpu_custom_call.1} parent=1 // pred_region
      %s12 = ssub.s32 256, 256
      %13 = vsyncadd [#allocation3], %s12
      %s15 = sshll.u32 [#allocation2], 4
      %s16 = int_to_ptr.vmem [resolvable:$true] %s15
      %18 = dma.hbm_to_vmem [thread:$0]  %s0, 256, %s16, [#allocation3]
    $region5: #{tpu_custom_call.1} parent=1 // pred_fallthru
      _
    // Predicated region
    $region6: #{tpu_custom_call.1} parent=1 // pred_check
      _
    $region7: #{tpu_custom_call.1} parent=1 // pred_check_branch
      %20 = sbr.rel (0) target = $region9
    $region8: #{tpu_custom_call.1} parent=1 // pred_region
      _
    $region9: #{tpu_custom_call.1} parent=1 // pred_fallthru
      _
    // Predicated region
    $region10: #{tpu_custom_call.1} parent=1 // pred_check
      _
    $region11: #{tpu_custom_call.1} parent=1 // pred_check_branch
      %22 = sbr.rel (0) target = $region13
    $region12: #{tpu_custom_call.1} parent=1 // pred_region
      %23 = dma.done [#allocation3], 256
    $region13: #{tpu_custom_call.1} parent=1 // pred_fallthru
      _
    %v24 = vld [vmem:[#allocation2] sm:$0xff]
    %v25 = vld [vmem:[#allocation2 + $0x8] sm:$0xff]
    %v26 = vld [vmem:[%s1] sm:$0xff]
    %28 = vset.pattern.permute.xlu0 0
    %29 = vperm.xlu0 %28, %v26
    %v30 = vpop.permute.xlu0 %29
    %v32 = vmul.f32 %v24, %v30
    %v33 = vmul.f32 %v25, %v30
    %34 = vset.pattern.permute.xlu0 1
    %35 = vperm.xlu0 %34, %v26
    %v36 = vpop.permute.xlu0 %35
    %v38 = vadd.f32 %v32, %v36
    %v39 = vadd.f32 %v33, %v36
    %40 = vst [vmem:[#allocation5] sm:$0xff] %v38
    %41 = vst [vmem:[#allocation5 + $0x8] sm:$0xff] %v39
    // Predicated region
    $region14: #{tpu_custom_call.1} parent=1 // pred_check
      _
    $region15: #{tpu_custom_call.1} parent=1 // pred_check_branch
      %43 = sbr.rel (0) target = $region17
    $region16: #{tpu_custom_call.1} parent=1 // pred_region
      %s45 = ssub.s32 256, 256
      %46 = vsyncadd [#allocation4], %s45
      %s48 = sshll.u32 [#allocation5], 4
      %s49 = int_to_ptr.vmem [resolvable:$true] %s48
      %51 = dma.vmem_to_hbm [thread:$0]  %s49, 256, %s2, [#allocation4]
    $region17: #{tpu_custom_call.1} parent=1 // pred_fallthru
      _
    // Predicated region
    $region18: #{tpu_custom_call.1} parent=1 // pred_check
      _
    $region19: #{tpu_custom_call.1} parent=1 // pred_check_branch
      %53 = sbr.rel (0) target = $region21
    $region20: #{tpu_custom_call.1} parent=1 // pred_region
      %54 = dma.done [#allocation4], 256
    $region21: #{tpu_custom_call.1} parent=1 // pred_fallthru
      _
    %55 = vsyncpa [#allocation3], 1
    %56 = vsyncpa [#allocation4], 1

</llo_original>
